<compile_context>
chip_gen: v7x
topology: tpu7x:2x2x1
jax: 0.10.0
libtpu: 0.0.40
codegen_flags: <defaults>
</compile_context>

<pallas_src>
import functools
import math

import jax
import jax.numpy as jnp
from jax.experimental import pallas as pl
from jax.experimental.pallas import tpu as pltpu


def _round_up(x, m):
    return ((x + m - 1) // m) * m


def _fused_add_rms_norm_kernel(x_ref, res_ref, w_ref, out_ref, resid_ref, *, eps):
    x = x_ref[...].astype(jnp.float32)
    r = res_ref[...].astype(jnp.float32)
    s = x + r                                            # residual add in fp32
    resid_ref[...] = s.astype(resid_ref.dtype)           # residual_in_fp32=True
    var = jnp.mean(s * s, axis=-1, keepdims=True)
    inv = jax.lax.rsqrt(var + eps)
    out_ref[...] = (s * inv * w_ref[...].astype(jnp.float32)).astype(out_ref.dtype)


def _rms_norm_kernel(x_ref, w_ref, out_ref, resid_ref, *, eps):
    s = x_ref[...].astype(jnp.float32)
    resid_ref[...] = s.astype(resid_ref.dtype)
    var = jnp.mean(s * s, axis=-1, keepdims=True)
    inv = jax.lax.rsqrt(var + eps)
    out_ref[...] = (s * inv * w_ref[...].astype(jnp.float32)).astype(out_ref.dtype)


def fused_add_rms_norm(hidden_states, weight, pre_norm_x=None, *,
                       eps=1e-5, block_rows=256):
    """FusedAddRMSNorm.forward: returns (normed_hidden_states, residual_fp32).

    hidden_states: [..., D]; pre_norm_x: same shape or None; weight: [D].
    drop_path is 0.0 / eval mode -> identity (matches the module defaults).
    """
    orig_shape = hidden_states.shape
    D = orig_shape[-1]
    M = 1
    for d in orig_shape[:-1]:
        M *= d

    x2 = hidden_states.reshape(M, D)
    r2 = None if pre_norm_x is None else pre_norm_x.reshape(M, D)
    w2 = weight.reshape(1, D)

    # Row tile: multiple of 8 sublanes; pad rows so the grid divides evenly.
    tm = min(block_rows, _round_up(M, 8))
    m_pad = _round_up(M, tm)
    if m_pad != M:
        pad = m_pad - M
        x2 = jnp.pad(x2, ((0, pad), (0, 0)))
        if r2 is not None:
            r2 = jnp.pad(r2, ((0, pad), (0, 0)))
    grid = (m_pad // tm,)

    # VMEM budget: big (tm, D) tiles (x, [res], out, resid_fp32), double-buffered,
    # plus the weight row and ~1 MiB slack.  Clamp to v7x-safe range.
    n_big = 4 if r2 is not None else 3
    vmem_bytes = n_big * 2 * tm * D * 4 + 2 * D * 4 + (1 << 20)
    vmem_bytes = int(min(max(vmem_bytes, 16 << 20), 64 << 20))

    row_spec = pl.BlockSpec((tm, D), lambda i: (i, 0))
    w_spec = pl.BlockSpec((1, D), lambda i: (0, 0))
    out_shapes = (
        jax.ShapeDtypeStruct((m_pad, D), hidden_states.dtype),  # normed output
        jax.ShapeDtypeStruct((m_pad, D), jnp.float32),           # residual (fp32)
    )
    out_specs = (row_spec, row_spec)
    cparams = pltpu.CompilerParams(
        dimension_semantics=("parallel",),
        vmem_limit_bytes=vmem_bytes,
    )

    if r2 is None:
        out, resid = pl.pallas_call(
            functools.partial(_rms_norm_kernel, eps=float(eps)),
            out_shape=out_shapes,
            grid=grid,
            in_specs=[row_spec, w_spec],
            out_specs=out_specs,
            compiler_params=cparams,
        )(x2, w2)
    else:
        out, resid = pl.pallas_call(
            functools.partial(_fused_add_rms_norm_kernel, eps=float(eps)),
            out_shape=out_shapes,
            grid=grid,
            in_specs=[row_spec, row_spec, w_spec],
            out_specs=out_specs,
            compiler_params=cparams,
        )(x2, r2, w2)

    out = out[:M].reshape(orig_shape)
    resid = resid[:M].reshape(orig_shape)
    return out, resid


def _reference(hidden_states, pre_norm_x, weight, eps):
    """Pure-JAX reference of the same forward (fused_add_norm, prenorm=True)."""
    s = hidden_states.astype(jnp.float32)
    if pre_norm_x is not None:
        s = s + pre_norm_x.astype(jnp.float32)
    var = jnp.mean(s * s, axis=-1, keepdims=True)
    out = (s * jax.lax.rsqrt(var + eps) * weight.astype(jnp.float32))
    return out.astype(hidden_states.dtype), s


if __name__ == "__main__":
    B, L, D = 2, 16, 128   # small, lane-dense (D multiple of 128), rows multiple of 8
    EPS = 1e-5
    dtype = jnp.float32

    key = jax.random.PRNGKey(0)
    k_x, k_r, k_w = jax.random.split(key, 3)
    hidden_states = jax.random.normal(k_x, (B, L, D)).astype(dtype)
    pre_norm_x = jax.random.normal(k_r, (B, L, D)).astype(dtype)
    weight = (1.0 + 0.02 * jax.random.normal(k_w, (D,))).astype(dtype)

    # Path 1: residual (pre_norm_x) provided -> fused add + RMSNorm.
    out, resid = fused_add_rms_norm(hidden_states, weight, pre_norm_x, eps=EPS)
    out = jax.block_until_ready(out)
    resid = jax.block_until_ready(resid)
    ref_out, ref_res = _reference(hidden_states, pre_norm_x, weight, EPS)
    assert out.shape == (B, L, D) and resid.shape == (B, L, D)
    assert resid.dtype == jnp.float32                      # residual_in_fp32=True
    assert jnp.allclose(out, ref_out, atol=1e-5, rtol=1e-5)
    assert jnp.allclose(resid, ref_res, atol=1e-5, rtol=1e-5)

    # Path 2: no residual (pre_norm_x=None) -> plain RMSNorm, residual = x (fp32).
    out2, resid2 = fused_add_rms_norm(hidden_states, weight, None, eps=EPS)
    out2 = jax.block_until_ready(out2)
    resid2 = jax.block_until_ready(resid2)
    ref_out2, ref_res2 = _reference(hidden_states, None, weight, EPS)
    assert jnp.allclose(out2, ref_out2, atol=1e-5, rtol=1e-5)
    assert jnp.allclose(resid2, ref_res2, atol=1e-5, rtol=1e-5)

    # TODO(synk): DropPath with drop_prob > 0 in training mode (stochastic depth)
    # and the LayerNorm variant (rms_norm=False) are config-gated off by the
    # module defaults used here and are not implemented in the kernel.
    print("KERNEL_OK")
</pallas_src>

<mosaic_0001>
module attributes {stable_mosaic.version = 11 : i64} {
  func.func @_fused_add_rms_norm_kernel(%arg0: i32, %arg1: memref<32x128xf32, #tpu.memory_space<vmem>>, %arg2: memref<32x128xf32, #tpu.memory_space<vmem>>, %arg3: memref<1x128xf32, #tpu.memory_space<vmem>>, %arg4: memref<32x128xf32, #tpu.memory_space<vmem>>, %arg5: memref<32x128xf32, #tpu.memory_space<vmem>>) attributes {dimension_semantics = [#tpu.dimension_semantics<parallel>], iteration_bounds = array<i64: 1>, scalar_prefetch = 0 : i64, scratch_operands = 0 : i64, tpu.core_type = #tpu.core_type<tc>, window_params = [{transform_indices = @transform_0, window_bounds = array<i64: 32, 128>}, {transform_indices = @transform_1, window_bounds = array<i64: 32, 128>}, {pipeline_mode = #tpu.pipeline_mode<synchronous>, transform_indices = @transform_2, window_bounds = array<i64: 1, 128>}, {transform_indices = @transform_3, window_bounds = array<i64: 32, 128>}, {transform_indices = @transform_4, window_bounds = array<i64: 32, 128>}]} {
    %c0 = arith.constant 0 : index
    %c0_0 = arith.constant 0 : index
    %0 = vector.load %arg1[%c0, %c0_0] : memref<32x128xf32, #tpu.memory_space<vmem>>, vector<32x128xf32>
    %c0_1 = arith.constant 0 : index
    %c0_2 = arith.constant 0 : index
    %1 = vector.load %arg2[%c0_1, %c0_2] : memref<32x128xf32, #tpu.memory_space<vmem>>, vector<32x128xf32>
    %2 = arith.addf %0, %1 : vector<32x128xf32>
    %c0_3 = arith.constant 0 : index
    %c0_4 = arith.constant 0 : index
    %3 = vector.load %arg5[%c0_3, %c0_4] : memref<32x128xf32, #tpu.memory_space<vmem>>, vector<32x128xf32>
    tpu.vector_store %arg5[%c0_3, %c0_4], %2 {strides = array<i32>} : memref<32x128xf32, #tpu.memory_space<vmem>>, vector<32x128xf32>,
    %4 = arith.mulf %2, %2 : vector<32x128xf32>
    %cst = arith.constant dense<0.000000e+00> : vector<32xf32>
    %5 = vector.multi_reduction <add>, %4, %cst [1] : vector<32x128xf32> to vector<32xf32>
    %6 = vector.shape_cast %5 : vector<32xf32> to vector<32x1xf32>
    %cst_5 = arith.constant 1.280000e+02 : f32
    %7 = vector.broadcast %cst_5 : f32 to vector<32x1xf32>
    %8 = arith.divf %6, %7 : vector<32x1xf32>
    %cst_6 = arith.constant 9.99999974E-6 : f32
    %9 = vector.broadcast %cst_6 : f32 to vector<32x1xf32>
    %10 = arith.addf %8, %9 : vector<32x1xf32>
    %11 = math.rsqrt %10 : vector<32x1xf32>
    %12 = vector.broadcast %11 : vector<32x1xf32> to vector<32x128xf32>
    %13 = arith.mulf %2, %12 : vector<32x128xf32>
    %c0_7 = arith.constant 0 : index
    %c0_8 = arith.constant 0 : index
    %14 = vector.load %arg3[%c0_7, %c0_8] : memref<1x128xf32, #tpu.memory_space<vmem>>, vector<1x128xf32>
    %15 = vector.broadcast %14 : vector<1x128xf32> to vector<32x128xf32>
    %16 = arith.mulf %13, %15 : vector<32x128xf32>
    %c0_9 = arith.constant 0 : index
    %c0_10 = arith.constant 0 : index
    %17 = vector.load %arg4[%c0_9, %c0_10] : memref<32x128xf32, #tpu.memory_space<vmem>>, vector<32x128xf32>
    tpu.vector_store %arg4[%c0_9, %c0_10], %16 {strides = array<i32>} : memref<32x128xf32, #tpu.memory_space<vmem>>, vector<32x128xf32>,
    return
  }
  func.func @transform_0(%arg0: i32) -> (i32, i32) {
    %c0_i32 = arith.constant 0 : i32
    %c0_i32_0 = arith.constant 0 : i32
    return %arg0, %c0_i32 : i32, i32
  }
  func.func @transform_1(%arg0: i32) -> (i32, i32) {
    %c0_i32 = arith.constant 0 : i32
    %c0_i32_0 = arith.constant 0 : i32
    return %arg0, %c0_i32 : i32, i32
  }
  func.func @transform_2(%arg0: i32) -> (i32, i32) {
    %c0_i32 = arith.constant 0 : i32
    %c0_i32_0 = arith.constant 0 : i32
    %c0_i32_1 = arith.constant 0 : i32
    return %c0_i32, %c0_i32_0 : i32, i32
  }
  func.func @transform_3(%arg0: i32) -> (i32, i32) {
    %c0_i32 = arith.constant 0 : i32
    %c0_i32_0 = arith.constant 0 : i32
    return %arg0, %c0_i32 : i32, i32
  }
  func.func @transform_4(%arg0: i32) -> (i32, i32) {
    %c0_i32 = arith.constant 0 : i32
    %c0_i32_0 = arith.constant 0 : i32
    return %arg0, %c0_i32 : i32, i32
  }
}

</mosaic_0001>

<llo_original>
// kernel: tpu_custom_call.1
$region0: #{tpu_custom_call.1}
  #allocation0 [shape = 'u32[]', space=smem, size = 0x4, offset = 0x4, fixed_abs, tag = 'smem constant byte address 0x4 - core index']
  #allocation1 [shape = 'u32[144,128]{1,0:T(1,128)}', space=vmem, size = 0x12000, scoped, tag = 'internal scratch']
  %s0 = inlined_call_operand.hbm [shape: f32[32,128], index: 0, kind: input, shape index: {}]
  %s1 = inlined_call_operand.hbm [shape: f32[32,128], index: 1, kind: input, shape index: {}]
  %s2 = inlined_call_operand.vmem [shape: f32[1,128], index: 2, kind: input, shape index: {}]
  %s3 = inlined_call_operand.hbm [shape: f32[32,128], index: 3, kind: output, shape index: {0}]
  %s4 = inlined_call_operand.hbm [shape: f32[32,128], index: 4, kind: output, shape index: {1}]
  %5 = xla_tuple %s3, %s4
  %s6 = sld [smem:[#allocation0]]
  $region38: #{tpu_custom_call.1} parent=0
    _
  %s8 = ssub.s32 1, %s6
  %s9 = scalar_select 0, %s8, %s6
  $region1: #{tpu_custom_call.1} parent=0
    #allocation2 [shape = 'u8[16384]{0}', space=vmem, size = 0x4000, scoped, tag = 'input window, operand 0, single buffered']
    #allocation3 [shape = 's32[1]{0}', space=sflag, size = 0x4, scoped, tag = 'scoped memory for tpu_custom_call.1']
    #allocation4 [shape = 's32[1]{0}', space=sflag, size = 0x4, scoped, tag = 'scoped memory for tpu_custom_call.1']
    #allocation5 [shape = 'u8[16384]{0}', space=vmem, size = 0x4000, scoped, tag = 'input window, operand 1, single buffered']
    #allocation6 [shape = 's32[1]{0}', space=sflag, size = 0x4, scoped, tag = 'scoped memory for tpu_custom_call.1']
    #allocation7 [shape = 'u8[16384]{0}', space=vmem, size = 0x4000, scoped, tag = 'output window, operand 0, single buffered']
    #allocation8 [shape = 'u8[16384]{0}', space=vmem, size = 0x4000, scoped, tag = 'output window, operand 1, single buffered']
    #allocation9 [shape = 's32[1]{0}', space=sflag, size = 0x4, scoped, tag = 'scoped memory for tpu_custom_call.1']
    %10 = vsyncpa [#allocation3], 0
    %11 = vsyncpa [#allocation6], 0
    %12 = vsyncpa [#allocation4], 0
    %13 = vsyncpa [#allocation9], 0
    // Predicated region
    $region2: #{tpu_custom_call.1} parent=1 // pred_check
      _
    $region3: #{tpu_custom_call.1} parent=1 // pred_check_branch
      %15 = sbr.rel (0) target = $region5
    $region4: #{tpu_custom_call.1} parent=1 // pred_region
      %s17 = ssub.s32 512, 512
      %18 = vsyncadd [#allocation3], %s17
      %s19 = sshll.u32 [#allocation2], 4
      %s20 = int_to_ptr.vmem [resolvable:$true] %s19
      %25 = dma.hbm_to_vmem [thread:$0]  %s0, 512, %s20, [#allocation3], 128, 128, 8
    $region5: #{tpu_custom_call.1} parent=1 // pred_fallthru
      _
    // Predicated region
    $region6: #{tpu_custom_call.1} parent=1 // pred_check
      _
    $region7: #{tpu_custom_call.1} parent=1 // pred_check_branch
      %27 = sbr.rel (0) target = $region9
    $region8: #{tpu_custom_call.1} parent=1 // pred_region
      %s29 = ssub.s32 512, 512
      %30 = vsyncadd [#allocation6], %s29
      %s31 = sshll.u32 [#allocation5], 4
      %s32 = int_to_ptr.vmem [resolvable:$true] %s31
      %37 = dma.hbm_to_vmem [thread:$0]  %s1, 512, %s32, [#allocation6], 128, 128, 8
    $region9: #{tpu_custom_call.1} parent=1 // pred_fallthru
      _
    // Predicated region
    $region10: #{tpu_custom_call.1} parent=1 // pred_check
      _
    $region11: #{tpu_custom_call.1} parent=1 // pred_check_branch
      %39 = sbr.rel (0) target = $region13
    $region12: #{tpu_custom_call.1} parent=1 // pred_region
      _
    $region13: #{tpu_custom_call.1} parent=1 // pred_fallthru
      _
    // Predicated region
    $region14: #{tpu_custom_call.1} parent=1 // pred_check
      _
    $region15: #{tpu_custom_call.1} parent=1 // pred_check_branch
      %41 = sbr.rel (0) target = $region17
    $region16: #{tpu_custom_call.1} parent=1 // pred_region
      %42 = dma.done [#allocation3], 512
    $region17: #{tpu_custom_call.1} parent=1 // pred_fallthru
      _
    // Predicated region
    $region18: #{tpu_custom_call.1} parent=1 // pred_check
      _
    $region19: #{tpu_custom_call.1} parent=1 // pred_check_branch
      %44 = sbr.rel (0) target = $region21
    $region20: #{tpu_custom_call.1} parent=1 // pred_region
      %45 = dma.done [#allocation6], 512
    $region21: #{tpu_custom_call.1} parent=1 // pred_fallthru
      _
    %v46 = vld [vmem:[#allocation2] sm:$0xff]
    %v47 = vld [vmem:[#allocation2 + $0x8] sm:$0xff]
    %v48 = vld [vmem:[#allocation2 + $0x10] sm:$0xff]
    %v49 = vld [vmem:[#allocation2 + $0x18] sm:$0xff]
    %v50 = vld [vmem:[#allocation5] sm:$0xff]
    %v51 = vld [vmem:[#allocation5 + $0x8] sm:$0xff]
    %v52 = vld [vmem:[#allocation5 + $0x10] sm:$0xff]
    %v53 = vld [vmem:[#allocation5 + $0x18] sm:$0xff]
    %v54 = vadd.f32 %v46, %v50
    %v55 = vadd.f32 %v47, %v51
    %v56 = vadd.f32 %v48, %v52
    %v57 = vadd.f32 %v49, %v53
    %58 = vst [vmem:[#allocation8] sm:$0xff] %v54
    %59 = vst [vmem:[#allocation8 + $0x8] sm:$0xff] %v55
    %60 = vst [vmem:[#allocation8 + $0x10] sm:$0xff] %v56
    %61 = vst [vmem:[#allocation8 + $0x18] sm:$0xff] %v57
    %v62 = vmul.f32 %v54, %v54
    %v63 = vmul.f32 %v55, %v55
    %v64 = vmul.f32 %v56, %v56
    %v65 = vmul.f32 %v57, %v57
    %66 = vadd.xlane.f32.xlu0 %v62
    %v67 = vpop.xlane.xlu0 %66
    %68 = vadd.xlane.f32.xlu0 %v63
    %v69 = vpop.xlane.xlu0 %68
    %70 = vadd.xlane.f32.xlu0 %v64
    %v71 = vpop.xlane.xlu0 %70
    %72 = vadd.xlane.f32.xlu0 %v65
    %v73 = vpop.xlane.xlu0 %72
    %v74 = vrcp.pop 128.0
    %v75 = vmul.f32 %v67, %v74
    %v76 = vmul.f32 %v69, %v74
    %v77 = vmul.f32 %v71, %v74
    %v78 = vmul.f32 %v73, %v74
    %v79 = vadd.f32 %v75, 1e-05
    %v80 = vadd.f32 %v76, 1e-05
    %v81 = vadd.f32 %v77, 1e-05
    %v82 = vadd.f32 %v78, 1e-05
    %v83 = vrsqrt.pop %v79
    %v84 = vrsqrt.pop %v80
    %v85 = vrsqrt.pop %v81
    %v86 = vrsqrt.pop %v82
    %v87 = vmul.f32 %v54, %v83
    %v88 = vmul.f32 %v55, %v84
    %v89 = vmul.f32 %v56, %v85
    %v90 = vmul.f32 %v57, %v86
    %v91 = vld [vmem:[%s2] sm:$0x1]
    %v93 = vlaneseq
    %v94 = vshrl.u32 %v93, 7
    %v95 = vsub.s32 0, %v94
    %v96 = vrot.slane %v91, %v95
    %v98 = vmul.f32 %v87, %v96
    %v99 = vmul.f32 %v88, %v96
    %v100 = vmul.f32 %v89, %v96
    %v101 = vmul.f32 %v90, %v96
    %102 = vst [vmem:[#allocation7] sm:$0xff] %v98
    %103 = vst [vmem:[#allocation7 + $0x8] sm:$0xff] %v99
    %104 = vst [vmem:[#allocation7 + $0x10] sm:$0xff] %v100
    %105 = vst [vmem:[#allocation7 + $0x18] sm:$0xff] %v101
    // Predicated region
    $region22: #{tpu_custom_call.1} parent=1 // pred_check
      _
    $region23: #{tpu_custom_call.1} parent=1 // pred_check_branch
      %107 = sbr.rel (0) target = $region25
    $region24: #{tpu_custom_call.1} parent=1 // pred_region
      %s109 = ssub.s32 512, 512
      %110 = vsyncadd [#allocation4], %s109
      %s111 = sshll.u32 [#allocation7], 4
      %s112 = int_to_ptr.vmem [resolvable:$true] %s111
      %117 = dma.vmem_to_hbm [thread:$0]  %s112, 512, %s3, [#allocation4], 128, 128, 8
    $region25: #{tpu_custom_call.1} parent=1 // pred_fallthru
      _
    // Predicated region
    $region26: #{tpu_custom_call.1} parent=1 // pred_check
      _
    $region27: #{tpu_custom_call.1} parent=1 // pred_check_branch
      %119 = sbr.rel (0) target = $region29
    $region28: #{tpu_custom_call.1} parent=1 // pred_region
      %s121 = ssub.s32 512, 512
      %122 = vsyncadd [#allocation9], %s121
      %s123 = sshll.u32 [#allocation8], 4
      %s124 = int_to_ptr.vmem [resolvable:$true] %s123
      %129 = dma.vmem_to_hbm [thread:$0]  %s124, 512, %s4, [#allocation9], 128, 128, 8
    $region29: #{tpu_custom_call.1} parent=1 // pred_fallthru
      _
    // Predicated region
    $region30: #{tpu_custom_call.1} parent=1 // pred_check
      _
    $region31: #{tpu_custom_call.1} parent=1 // pred_check_branch
      %131 = sbr.rel (0) target = $region33
    $region32: #{tpu_custom_call.1} parent=1 // pred_region
      %132 = dma.done [#allocation4], 512
    $region33: #{tpu_custom_call.1} parent=1 // pred_fallthru
      _
    // Predicated region
    $region34: #{tpu_custom_call.1} parent=1 // pred_check
      _
    $region35: #{tpu_custom_call.1} parent=1 // pred_check_branch
      %134 = sbr.rel (0) target = $region37
    $region36: #{tpu_custom_call.1} parent=1 // pred_region
      %135 = dma.done [#allocation9], 512
    $region37: #{tpu_custom_call.1} parent=1 // pred_fallthru
      _
    %136 = vsyncpa [#allocation3], 1
    %137 = vsyncpa [#allocation6], 1
    %138 = vsyncpa [#allocation4], 1
    %139 = vsyncpa [#allocation9], 1

</llo_original>
